<compile_context>
chip_gen: v7x
topology: tpu7x:2x2x1
jax: 0.10.0
libtpu: 0.0.40
codegen_flags: <defaults>
</compile_context>

<pallas_src>
import functools

import jax
import jax.numpy as jnp
from jax.experimental import pallas as pl
from jax.experimental.pallas import tpu as pltpu


def _scores_exp(q, k, scale):
    """Shared prologue: scaled scores and the numerically-stable exp/denominator."""
    # x1 @ x2^T : contract over the feature dim, no explicit transpose needed.
    s = jax.lax.dot_general(
        q, k, (((1,), (1,)), ((), ())), preferred_element_type=jnp.float32
    )  # (M, N)
    if scale != 1.0:
        s = s * scale
    m = jnp.max(s, axis=-1, keepdims=True)
    e = jnp.exp(s - m)
    denom = jnp.sum(e, axis=-1, keepdims=True)
    return e, denom


def _sdpa_kernel(x1_ref, x2_ref, o_ref, *, scale):
    """Inference / p==0 variant: matmul -> scale -> softmax -> matmul."""
    q = x1_ref[0]  # (M, K)
    k = x2_ref[0]  # (N, K)
    e, denom = _scores_exp(q, k, scale)
    p = e * pl.reciprocal(denom, approx=True)
    o_ref[0] = jnp.dot(p, k, preferred_element_type=jnp.float32).astype(o_ref.dtype)


def _sdpa_dropout_kernel(x1_ref, x2_ref, u_ref, o_ref, *, scale, dropout_p):
    """Training variant: matmul -> scale -> softmax -> dropout -> matmul."""
    q = x1_ref[0]  # (M, K)
    k = x2_ref[0]  # (N, K)
    e, denom = _scores_exp(q, k, scale)
    # Fold the dropout rescale 1/(1-p) into the (M,1) softmax reciprocal so the
    # mask application is just one select (no extra broadcast multiply).
    inv = pl.reciprocal(denom, approx=True) * (1.0 / (1.0 - dropout_p))
    p = e * inv
    keep = u_ref[0] >= dropout_p  # u ~ U[0,1): keep with prob (1 - p)
    p = jnp.where(keep, p, 0.0)
    o_ref[0] = jnp.dot(p, k, preferred_element_type=jnp.float32).astype(o_ref.dtype)


@functools.partial(jax.jit, static_argnames=("scale_factor", "dropout_p", "training"))
def model_forward(x1, x2, key, *, scale_factor=1.0, dropout_p=0.3, training=True):
    """Pallas implementation of Model.forward (F.dropout defaults to training=True)."""
    B, M, K = x1.shape
    B2, N, K2 = x2.shape
    assert B == B2 and K == K2

    full = lambda shape: pl.BlockSpec(shape, lambda: (0,) * len(shape))
    out_shape = jax.ShapeDtypeStruct((B, M, K), jnp.float32)
    scale = float(scale_factor)

    use_dropout = training and dropout_p > 0.0
    if use_dropout:
        # Dropout randomness drawn outside the kernel (jax.random), passed in as a
        # uniform tensor: works identically on real TPU and in interpret mode.
        # Note: vary `key` per step in a training loop, or the mask repeats.
        u = jax.random.uniform(key, (B, M, N), dtype=jnp.float32)
        kernel = functools.partial(
            _sdpa_dropout_kernel, scale=scale, dropout_p=float(dropout_p)
        )
        return pl.pallas_call(
            kernel,
            out_shape=out_shape,
            in_specs=[full((B, M, K)), full((B, N, K)), full((B, M, N))],
            out_specs=full((B, M, K)),
        )(x1, x2, u)

    # Specialized inference path: no RNG input, no mask math compiled in.
    kernel = functools.partial(_sdpa_kernel, scale=scale)
    return pl.pallas_call(
        kernel,
        out_shape=out_shape,
        in_specs=[full((B, M, K)), full((B, N, K))],
        out_specs=full((B, M, K)),
    )(x1, x2)


if __name__ == "__main__":
    key = jax.random.PRNGKey(0)
    k1, k2, kd = jax.random.split(key, 3)
    # shapes from the module: x1 = randn(1, 10, 16), x2 = randn(1, 5, 16)
    x1 = jax.random.normal(k1, (1, 10, 16), dtype=jnp.float32)
    x2 = jax.random.normal(k2, (1, 5, 16), dtype=jnp.float32)

    # Training path (dropout active, as in the module's F.dropout default).
    out = model_forward(x1, x2, kd, scale_factor=1.0, dropout_p=0.3, training=True)
    out = jax.block_until_ready(out)
    assert out.shape == (1, 10, 16)
    assert bool(jnp.all(jnp.isfinite(out)))

    # Inference path: deterministic, check against a pure-JAX reference.
    out_eval = model_forward(x1, x2, kd, scale_factor=1.0, dropout_p=0.3, training=False)
    out_eval = jax.block_until_ready(out_eval)
    ref = jnp.einsum(
        "bmn,bnk->bmk",
        jax.nn.softmax(jnp.einsum("bmk,bnk->bmn", x1, x2), axis=-1),
        x2,
    )
    assert out_eval.shape == (1, 10, 16)
    assert bool(jnp.allclose(out_eval, ref, atol=5e-3, rtol=5e-3))

    # TODO(synk): if this op is invoked per-token/per-layer, batch many (M,N,K)
    # problems into one pallas_call with a grid to amortize launch overhead.
    print("KERNEL_OK")
</pallas_src>

<mosaic_0001>
module attributes {stable_mosaic.version = 11 : i64} {
  func.func @_sdpa_dropout_kernel(%arg0: memref<1x10x16xf32, #tpu.memory_space<vmem>>, %arg1: memref<1x5x16xf32, #tpu.memory_space<vmem>>, %arg2: memref<1x10x5xf32, #tpu.memory_space<vmem>>, %arg3: memref<1x10x16xf32, #tpu.memory_space<vmem>>) attributes {dimension_semantics = [], scalar_prefetch = 0 : i64, scratch_operands = 0 : i64, tpu.core_type = #tpu.core_type<tc>} {
    %c0 = arith.constant 0 : index
    %c0_0 = arith.constant 0 : index
    %c0_1 = arith.constant 0 : index
    %0 = vector.load %arg0[%c0, %c0_0, %c0_1] : memref<1x10x16xf32, #tpu.memory_space<vmem>>, vector<1x10x16xf32>
    %1 = vector.shape_cast %0 : vector<1x10x16xf32> to vector<10x16xf32>
    %c0_2 = arith.constant 0 : index
    %c0_3 = arith.constant 0 : index
    %c0_4 = arith.constant 0 : index
    %2 = vector.load %arg1[%c0_2, %c0_3, %c0_4] : memref<1x5x16xf32, #tpu.memory_space<vmem>>, vector<1x5x16xf32>
    %3 = vector.shape_cast %2 : vector<1x5x16xf32> to vector<5x16xf32>
    %cst = arith.constant dense<0.000000e+00> : vector<10x5xf32>
    %4 = tpu.matmul %1, %3, %cst {dimension_numbers = #tpu.dot_dimension_numbers<[1], [1], [0], [0], [0, 0, 1, 0], [], []>} : vector<10x16xf32>, vector<5x16xf32>, vector<10x5xf32> -> vector<10x5xf32>
    %cst_5 = arith.constant dense<0xFF800000> : vector<10xf32>
    %5 = vector.multi_reduction <maximumf>, %4, %cst_5 [1] : vector<10x5xf32> to vector<10xf32>
    %6 = vector.shape_cast %5 : vector<10xf32> to vector<10x1xf32>
    %7 = vector.broadcast %6 : vector<10x1xf32> to vector<10x5xf32>
    %8 = arith.subf %4, %7 : vector<10x5xf32>
    %9 = math.exp %8 : vector<10x5xf32>
    %cst_6 = arith.constant dense<0.000000e+00> : vector<10xf32>
    %10 = vector.multi_reduction <add>, %9, %cst_6 [1] : vector<10x5xf32> to vector<10xf32>
    %11 = vector.shape_cast %10 : vector<10xf32> to vector<10x1xf32>
    %12 = tpu.reciprocal %11 {approx = true} : vector<10x1xf32> -> vector<10x1xf32>
    %cst_7 = arith.constant 1.42857146 : f32
    %13 = vector.broadcast %cst_7 : f32 to vector<10x1xf32>
    %14 = arith.mulf %12, %13 : vector<10x1xf32>
    %15 = vector.broadcast %14 : vector<10x1xf32> to vector<10x5xf32>
    %16 = arith.mulf %9, %15 : vector<10x5xf32>
    %c0_8 = arith.constant 0 : index
    %c0_9 = arith.constant 0 : index
    %c0_10 = arith.constant 0 : index
    %17 = vector.load %arg2[%c0_8, %c0_9, %c0_10] : memref<1x10x5xf32, #tpu.memory_space<vmem>>, vector<1x10x5xf32>
    %18 = vector.shape_cast %17 : vector<1x10x5xf32> to vector<10x5xf32>
    %cst_11 = arith.constant 3.000000e-01 : f32
    %19 = vector.broadcast %cst_11 : f32 to vector<10x5xf32>
    %20 = arith.cmpf oge, %18, %19 : vector<10x5xf32>
    %cst_12 = arith.constant 0.000000e+00 : f32
    %21 = vector.broadcast %cst_12 : f32 to vector<10x5xf32>
    %22 = arith.select %20, %16, %21 : vector<10x5xi1>, vector<10x5xf32>
    %cst_13 = arith.constant dense<0.000000e+00> : vector<10x16xf32>
    %23 = tpu.matmul %22, %3, %cst_13 {dimension_numbers = #tpu.dot_dimension_numbers<[1], [0], [0], [1], [0, 0, 1, 1], [], []>} : vector<10x5xf32>, vector<5x16xf32>, vector<10x16xf32> -> vector<10x16xf32>
    %c0_14 = arith.constant 0 : index
    %c0_15 = arith.constant 0 : index
    %c0_16 = arith.constant 0 : index
    %24 = vector.load %arg3[%c0_14, %c0_15, %c0_16] : memref<1x10x16xf32, #tpu.memory_space<vmem>>, vector<1x10x16xf32>
    %25 = vector.shape_cast %24 : vector<1x10x16xf32> to vector<10x16xf32>
    %26 = vector.shape_cast %23 : vector<10x16xf32> to vector<1x10x16xf32>
    tpu.vector_store %arg3[%c0_14, %c0_15, %c0_16], %26 {strides = array<i32>} : memref<1x10x16xf32, #tpu.memory_space<vmem>>, vector<1x10x16xf32>,
    return
  }
}

</mosaic_0001>

<llo_original>
// kernel: model_forward.1
$region0: #{model_forward.1}
  #allocation0 [shape = 'u32[]', space=smem, size = 0x4, offset = 0x4, fixed_abs, tag = 'smem constant byte address 0x4 - core index']
  #allocation1 [shape = 'u32[144,128]{1,0:T(1,128)}', space=vmem, size = 0x12000, scoped, tag = 'internal scratch']
  %s0 = inlined_call_operand.vmem [shape: f32[1,10,16], index: 0, kind: input, shape index: {}]
  %s1 = inlined_call_operand.vmem [shape: f32[1,5,16], index: 1, kind: input, shape index: {}]
  %s2 = inlined_call_operand.vmem [shape: f32[1,10,5], index: 2, kind: input, shape index: {}]
  %s3 = inlined_call_operand.vmem [shape: f32[1,10,16], index: 3, kind: output, shape index: {}]
  %s4 = sld [smem:[#allocation0]]
  $region22: #{model_forward.1} parent=0
    _
  %s6 = ssub.s32 1, %s4
  %s7 = scalar_select 0, %s6, %s4
  // Predicated region
  $region2: #{model_forward.1} parent=0 // pred_check
    _
  $region3: #{model_forward.1} parent=0 // pred_check_branch
    %9 = sbr.rel (0) target = $region5
  $region4: #{model_forward.1} parent=0 // pred_region
    _
  $region5: #{model_forward.1} parent=0 // pred_fallthru
    _
  // Predicated region
  $region6: #{model_forward.1} parent=0 // pred_check
    _
  $region7: #{model_forward.1} parent=0 // pred_check_branch
    %11 = sbr.rel (0) target = $region9
  $region8: #{model_forward.1} parent=0 // pred_region
    _
  $region9: #{model_forward.1} parent=0 // pred_fallthru
    _
  // Predicated region
  $region10: #{model_forward.1} parent=0 // pred_check
    _
  $region11: #{model_forward.1} parent=0 // pred_check_branch
    %13 = sbr.rel (0) target = $region13
  $region12: #{model_forward.1} parent=0 // pred_region
    _
  $region13: #{model_forward.1} parent=0 // pred_fallthru
    _
  %v14 = vld [vmem:[%s0] sm:$0xff]
  %v15 = vld [vmem:[%s0 + $0x8] sm:$0x3]
  %v16 = vld [vmem:[%s1] sm:$0x1f]
  %vm17 = vcmask 130048
  %v19 = vsel %vm17, %v14, 0
  %v22 = vsel %vm17, %v15, 0
  %v25 = vsel %vm17, %v16, 0
  %27 = vmatprep.subr.mxu0 0.0
  %28 = vmatpush1.xpose.msra.mxu0 %v25
  %29 = vmatprep.subr.mxu0 0.0
  %30 = vmatpush1.xpose.msra.mxu0 0.0
  %31 = vmatprep.subr.mxu0 0.0
  %32 = vmatpush1.xpose.msra.mxu0 0.0
  %33 = vmatprep.subr.mxu0 0.0
  %34 = vmatpush1.xpose.msra.mxu0 0.0
  %35 = vmatprep.subr.mxu0 0.0
  %36 = vmatpush1.xpose.msra.mxu0 0.0
  %37 = vmatprep.subr.mxu0 0.0
  %38 = vmatpush1.xpose.msra.mxu0 0.0
  %39 = vmatprep.subr.mxu0 0.0
  %40 = vmatpush1.xpose.msra.mxu0 0.0
  %41 = vmatprep.subr.mxu0 0.0
  %42 = vmatpush1.xpose.msra.mxu0 0.0
  %43 = vmatprep.subr.mxu0 0.0
  %44 = vmatpush1.xpose.msra.mxu0 0.0
  %45 = vmatprep.subr.mxu0 0.0
  %46 = vmatpush1.xpose.msra.mxu0 0.0
  %47 = vmatprep.subr.mxu0 0.0
  %48 = vmatpush1.xpose.msra.mxu0 0.0
  %49 = vmatprep.subr.mxu0 0.0
  %50 = vmatpush1.xpose.msra.mxu0 0.0
  %51 = vmatprep.subr.mxu0 0.0
  %52 = vmatpush1.xpose.msra.mxu0 0.0
  %53 = vmatprep.subr.mxu0 0.0
  %54 = vmatpush1.xpose.msra.mxu0 0.0
  %55 = vmatprep.subr.mxu0 0.0
  %56 = vmatpush1.xpose.msra.mxu0 0.0
  %57 = vmatprep.subr.mxu0 0.0
  %58 = vmatpush1.xpose.msra.mxu0 0.0
  %59 = vmatprep.subr.mxu0 0.0
  %60 = vmatpush1.xpose.msra.mxu0 0.0
  %61 = vmatprep.subr.mxu0 0.0
  %62 = vmatpush1.xpose.msra.mxu0 0.0
  %63 = vmatprep.subr.mxu0 0.0
  %64 = vmatpush1.xpose.msra.mxu0 0.0
  %65 = vmatprep.subr.mxu0 0.0
  %66 = vmatpush1.xpose.msra.mxu0 0.0
  %67 = vmatprep.subr.mxu0 0.0
  %68 = vmatpush1.xpose.msra.mxu0 0.0
  %69 = vmatprep.subr.mxu0 0.0
  %70 = vmatpush1.xpose.msra.mxu0 0.0
  %71 = vmatprep.subr.mxu0 0.0
  %72 = vmatpush1.xpose.msra.mxu0 0.0
  %73 = vmatprep.subr.mxu0 0.0
  %74 = vmatpush1.xpose.msra.mxu0 0.0
  %75 = vmatprep.subr.mxu0 0.0
  %76 = vmatpush1.xpose.msra.mxu0 0.0
  %77 = vmatprep.subr.mxu0 0.0
  %78 = vmatpush1.xpose.msra.mxu0 0.0
  %79 = vmatprep.subr.mxu0 0.0
  %80 = vmatpush1.xpose.msra.mxu0 0.0
  %81 = vmatprep.subr.mxu0 0.0
  %82 = vmatpush1.xpose.msra.mxu0 0.0
  %83 = vmatprep.subr.mxu0 0.0
  %84 = vmatpush1.xpose.msra.mxu0 0.0
  %85 = vmatprep.subr.mxu0 0.0
  %86 = vmatpush1.xpose.msra.mxu0 0.0
  %87 = vmatprep.subr.mxu0 0.0
  %88 = vmatpush1.xpose.msra.mxu0 0.0
  %89 = vmatprep.subr.mxu0 0.0
  %90 = vmatpush1.xpose.msra.mxu0 0.0
  %91 = vmatprep.mubr.f32.mxu0 0.0
  %92 = vmatmul.mubr.f32.gmra.mrb[0].mxu0 %v19
  %v93 = vpop.f32.mrb[0].mxu0
  %v94 = vadd.f32 0.0, %v93
  %v95 = vpop.f32.mrb[0].mxu0
  %96 = vmatprep.mubr.f32.mxu0 0.0
  %97 = vmatmul.mubr.f32.gmra.mrb[0].mxu0 %v22
  %v98 = vpop.f32.mrb[0].mxu0
  %v99 = vadd.f32 0.0, %v98
  %v100 = vpop.f32.mrb[0].mxu0
  %101 = vdwg.mxu0
  %vm102 = vcmask 39936
  %v103 = vsel %vm102, %v94, -inf
  %104 = vmax.xlane.f32.xlu0 %v103
  %v105 = vpop.xlane.xlu0 %104
  %vm106 = vcmask 33792
  %v107 = vsel %vm106, %v99, -inf
  %108 = vmax.xlane.f32.xlu0 %v107
  %v109 = vpop.xlane.xlu0 %108
  %v110 = vsub.f32 %v94, %v105
  %v111 = vsub.f32 %v99, %v109
  %v112 = vmul.f32 %v110, 1.442695
  %v113 = vpow.pop %v112
  %v114 = vmul.f32 %v111, 1.442695
  %v115 = vpow.pop %v114
  %v116 = vsel %vm102, %v113, 0.0
  %117 = vadd.xlane.f32.xlu0 %v116
  %v118 = vpop.xlane.xlu0 %117
  %v119 = vsel %vm106, %v115, 0.0
  %120 = vadd.xlane.f32.xlu0 %v119
  %v121 = vpop.xlane.xlu0 %120
  %v122 = vrcp.pop %v118
  %v123 = vrcp.pop %v121
  %v124 = vmul.f32 %v122, 1.4285715
  %v125 = vmul.f32 %v123, 1.4285715
  %v126 = vmul.f32 %v113, %v124
  %v127 = vmul.f32 %v115, %v125
  %v128 = vld [vmem:[%s2] sm:$0xff]
  %v129 = vld [vmem:[%s2 + $0x8] sm:$0x3]
  %vm130 = vcmp.ge.f32.partialorder %v128, 0.3
  %vm131 = vcmp.ge.f32.partialorder %v129, 0.3
  %v132 = vsel %vm130, %v126, 0.0
  %v133 = vsel %vm131, %v127, 0.0
  %v135 = vsel %vm102, %v132, 0
  %v138 = vsel %vm102, %v133, 0
  %vm140 = vcmask 1044480
  %v141 = vsel %vm140, %v16, 0
  %143 = vmatprep.subr.mxu0 0.0
  %144 = vmatpush1.msra.mxu0 %v141
  %145 = vmatprep.subr.mxu0 0.0
  %146 = vmatpush1.msra.mxu0 0.0
  %147 = vmatprep.subr.mxu0 0.0
  %148 = vmatpush1.msra.mxu0 0.0
  %149 = vmatprep.subr.mxu0 0.0
  %150 = vmatpush1.msra.mxu0 0.0
  %151 = vmatprep.subr.mxu0 0.0
  %152 = vmatpush1.msra.mxu0 0.0
  %153 = vmatprep.subr.mxu0 0.0
  %154 = vmatpush1.msra.mxu0 0.0
  %155 = vmatprep.subr.mxu0 0.0
  %156 = vmatpush1.msra.mxu0 0.0
  %157 = vmatprep.subr.mxu0 0.0
  %158 = vmatpush1.msra.mxu0 0.0
  %159 = vmatprep.subr.mxu0 0.0
  %160 = vmatpush1.msra.mxu0 0.0
  %161 = vmatprep.subr.mxu0 0.0
  %162 = vmatpush1.msra.mxu0 0.0
  %163 = vmatprep.subr.mxu0 0.0
  %164 = vmatpush1.msra.mxu0 0.0
  %165 = vmatprep.subr.mxu0 0.0
  %166 = vmatpush1.msra.mxu0 0.0
  %167 = vmatprep.subr.mxu0 0.0
  %168 = vmatpush1.msra.mxu0 0.0
  %169 = vmatprep.subr.mxu0 0.0
  %170 = vmatpush1.msra.mxu0 0.0
  %171 = vmatprep.subr.mxu0 0.0
  %172 = vmatpush1.msra.mxu0 0.0
  %173 = vmatprep.subr.mxu0 0.0
  %174 = vmatpush1.msra.mxu0 0.0
  %175 = vmatprep.subr.mxu0 0.0
  %176 = vmatpush1.msra.mxu0 0.0
  %177 = vmatprep.subr.mxu0 0.0
  %178 = vmatpush1.msra.mxu0 0.0
  %179 = vmatprep.subr.mxu0 0.0
  %180 = vmatpush1.msra.mxu0 0.0
  %181 = vmatprep.subr.mxu0 0.0
  %182 = vmatpush1.msra.mxu0 0.0
  %183 = vmatprep.subr.mxu0 0.0
  %184 = vmatpush1.msra.mxu0 0.0
  %185 = vmatprep.subr.mxu0 0.0
  %186 = vmatpush1.msra.mxu0 0.0
  %187 = vmatprep.subr.mxu0 0.0
  %188 = vmatpush1.msra.mxu0 0.0
  %189 = vmatprep.subr.mxu0 0.0
  %190 = vmatpush1.msra.mxu0 0.0
  %191 = vmatprep.subr.mxu0 0.0
  %192 = vmatpush1.msra.mxu0 0.0
  %193 = vmatprep.subr.mxu0 0.0
  %194 = vmatpush1.msra.mxu0 0.0
  %195 = vmatprep.subr.mxu0 0.0
  %196 = vmatpush1.msra.mxu0 0.0
  %197 = vmatprep.subr.mxu0 0.0
  %198 = vmatpush1.msra.mxu0 0.0
  %199 = vmatprep.subr.mxu0 0.0
  %200 = vmatpush1.msra.mxu0 0.0
  %201 = vmatprep.subr.mxu0 0.0
  %202 = vmatpush1.msra.mxu0 0.0
  %203 = vmatprep.subr.mxu0 0.0
  %204 = vmatpush1.msra.mxu0 0.0
  %205 = vmatprep.subr.mxu0 0.0
  %206 = vmatpush1.msra.mxu0 0.0
  %207 = vmatprep.mubr.f32.mxu0 0.0
  %208 = vmatmul.mubr.f32.gmra.mrb[0].mxu0 %v135
  %v209 = vpop.f32.mrb[0].mxu0
  %v210 = vadd.f32 0.0, %v209
  %v211 = vpop.f32.mrb[0].mxu0
  %212 = vmatprep.mubr.f32.mxu0 0.0
  %213 = vmatmul.mubr.f32.gmra.mrb[0].mxu0 %v138
  %v214 = vpop.f32.mrb[0].mxu0
  %v215 = vadd.f32 0.0, %v214
  %v216 = vpop.f32.mrb[0].mxu0
  %217 = vdwg.mxu0
  %218 = vst.msk [vmem:[%s3] sm:$0xff] %vm17, %v210
  %vm219 = vcmask 123904
  %220 = vst.msk [vmem:[%s3 + $0x8] sm:$0x3] %vm219, %v215
  // Predicated region
  $region14: #{model_forward.1} parent=0 // pred_check
    _
  $region15: #{model_forward.1} parent=0 // pred_check_branch
    %222 = sbr.rel (0) target = $region17
  $region16: #{model_forward.1} parent=0 // pred_region
    _
  $region17: #{model_forward.1} parent=0 // pred_fallthru
    _
  // Predicated region
  $region18: #{model_forward.1} parent=0 // pred_check
    _
  $region19: #{model_forward.1} parent=0 // pred_check_branch
    %224 = sbr.rel (0) target = $region21
  $region20: #{model_forward.1} parent=0 // pred_region
    _
  $region21: #{model_forward.1} parent=0 // pred_fallthru
    _

</llo_original>
